<compile_context>
chip_gen: v6e
topology: v6e:2x2x1
jax: 0.10.0
libtpu: 0.0.40
codegen_flags: <defaults>
</compile_context>

<pallas_src>
import functools

import jax
import jax.numpy as jnp
from jax.experimental import pallas as pl
from jax.experimental.pallas import tpu as pltpu

_NEG_BIG = -1.0e30  # finite "-inf" used to disable padded class columns


def _round_up(x, m):
    return (x + m - 1) // m * m


def _online_update(logits, j, lab_ref, m_ref, l_ref, lab_acc_ref, *, tc, exp_dtype):
    """Online-softmax-style update of (m, l, label_logit) over a [tb, tc] tile."""
    col = jax.lax.broadcasted_iota(jnp.int32, logits.shape, 1) + j * tc
    # tile-aware label "gather": exactly one column matches across all class tiles
    lab_mask = col == lab_ref[...]
    lab_acc_ref[...] += jnp.sum(jnp.where(lab_mask, logits, 0.0),
                                axis=-1, keepdims=True)

    # padded class columns carry a -1e30 bias -> never win the max, exp -> 0.
    m_prev = m_ref[...]
    m_new = jnp.maximum(m_prev, jnp.max(logits, axis=-1, keepdims=True))
    z = logits - m_new
    if jnp.dtype(exp_dtype) != jnp.dtype(jnp.float32):
        z = z.astype(exp_dtype)          # bf16 exp: ~2x EUP throughput (v6e/v7x)
    p = jnp.exp(z).astype(jnp.float32)   # accumulate in f32
    l_ref[...] = jnp.exp(m_prev - m_new) * l_ref[...] + jnp.sum(p, axis=-1,
                                                                keepdims=True)
    m_ref[...] = m_new


def _ce_kernel_single_k(x_ref, w_ref, b_ref, lab_ref, out_ref,
                        m_ref, l_ref, lab_acc_ref, *, tc, exp_dtype):
    """2-D grid (batch tile i, class tile j); whole H contraction per step."""
    j = pl.program_id(1)
    nj = pl.num_programs(1)

    @pl.when(j == 0)
    def _():
        m_ref[...] = jnp.full_like(m_ref, -jnp.inf)
        l_ref[...] = jnp.zeros_like(l_ref)
        lab_acc_ref[...] = jnp.zeros_like(lab_acc_ref)

    # bf16 x bf16 -> f32 on the MXU; bias fused into the epilogue add.
    logits = jnp.dot(x_ref[...], w_ref[...],
                     preferred_element_type=jnp.float32) + b_ref[...]
    _online_update(logits, j, lab_ref, m_ref, l_ref, lab_acc_ref,
                   tc=tc, exp_dtype=exp_dtype)

    @pl.when(j == nj - 1)
    def _():
        # sum_c exp(logit_c - label_logit) = exp(m - label_logit) * l
        out_ref[...] = jnp.exp(m_ref[...] - lab_acc_ref[...]) * l_ref[...]


def _ce_kernel_split_k(x_ref, w_ref, b_ref, lab_ref, out_ref,
                       acc_ref, m_ref, l_ref, lab_acc_ref, *, tc, exp_dtype):
    """3-D grid fallback (batch tile i, class tile j, K tile k) for huge H."""
    j = pl.program_id(1)
    k = pl.program_id(2)
    nj = pl.num_programs(1)
    nk = pl.num_programs(2)

    @pl.when(jnp.logical_and(j == 0, k == 0))
    def _():
        m_ref[...] = jnp.full_like(m_ref, -jnp.inf)
        l_ref[...] = jnp.zeros_like(l_ref)
        lab_acc_ref[...] = jnp.zeros_like(lab_acc_ref)

    part = jnp.dot(x_ref[...], w_ref[...], preferred_element_type=jnp.float32)

    @pl.when(k == 0)
    def _():
        acc_ref[...] = part + b_ref[...]   # bias folded into first write (no init pass)

    @pl.when(k > 0)
    def _():
        acc_ref[...] += part

    @pl.when(k == nk - 1)
    def _():
        _online_update(acc_ref[...], j, lab_ref, m_ref, l_ref, lab_acc_ref,
                       tc=tc, exp_dtype=exp_dtype)

    @pl.when(jnp.logical_and(j == nj - 1, k == nk - 1))
    def _():
        out_ref[...] = jnp.exp(m_ref[...] - lab_acc_ref[...]) * l_ref[...]


def cross_entropy_wrapper(x, w, b, labels, *,
                          tb=256, tc=1024, tk=2048,
                          split_k=None, exp_dtype=jnp.bfloat16,
                          min_batch_tiles=1,
                          vmem_budget_bytes=26 << 20):
    """x:[B,H] f32, w:[H,C] f32, b:[C] f32, labels:[B] int -> [B,1] f32.

    v5e: pass exp_dtype=jnp.float32 (no bf16 EUP).
    v7x: pass min_batch_tiles=2 so the "parallel" batch axis feeds both TCs.
    """
    B, H = x.shape
    H2, C = w.shape
    assert H == H2 and labels.shape == (B,) and b.shape == (C,)

    # ---- tile selection ------------------------------------------------------
    # bf16 x packs 16 rows per sublane tile -> keep tb a multiple of 16.
    tb = max(16, min(_round_up(tb, 16), _round_up(B, 16)))
    if min_batch_tiles > 1:
        b16 = _round_up(B, 16)
        tb_cap = _round_up((b16 + min_batch_tiles - 1) // min_batch_tiles, 16)
        tb = max(16, min(tb, tb_cap))
    Hp = _round_up(H, 128)
    tc = max(128, min(_round_up(tc, 128), _round_up(C, 128)))

    def _fits_single_k(tc_):
        # double-buffered x & W (bf16) + f32 dot temp + bias + headroom
        return (2 * tb * Hp * 2 + 2 * Hp * tc_ * 2 + tb * tc_ * 4
                + 2 * tc_ * 4 + (64 << 10)) <= vmem_budget_bytes

    if split_k is None:
        tc_try = tc
        while tc_try > 256 and not _fits_single_k(tc_try):
            tc_try = _round_up(tc_try // 2, 128)
        if _fits_single_k(tc_try):
            tc, split_k = tc_try, False
        else:
            split_k = True

    if not split_k:
        tk = Hp                                   # whole contraction per step
    else:
        tk = max(128, min(_round_up(tk, 128), Hp))
        while tk > 128 and (2 * tb * tk * 2 + 2 * tk * tc * 2 + tb * tc * 4
                            + 2 * tc * 4 + (64 << 10)) > vmem_budget_bytes:
            tk = max(128, _round_up(tk // 2, 128))

    Bp = _round_up(B, tb)
    Cp = _round_up(C, tc)
    Hp = _round_up(H, tk)

    # ---- pad / cast without materializing f32 temporaries --------------------
    def _pad2(a, rows, cols, value=0):
        pr, pc = rows - a.shape[0], cols - a.shape[1]
        if pr or pc:
            a = jnp.pad(a, ((0, pr), (0, pc)), constant_values=value)
        return a

    xp = _pad2(x.astype(jnp.bfloat16), Bp, Hp)
    wp = _pad2(w.astype(jnp.bfloat16), Hp, Cp)
    # padded class columns get a huge negative bias -> no in-kernel class mask.
    bp = _pad2(b.astype(jnp.float32).reshape(1, C), 1, Cp, value=_NEG_BIG)
    lp = _pad2(labels.astype(jnp.int32).reshape(B, 1), Bp, 1)

    small_scratch = [pltpu.VMEM((tb, 1), jnp.float32),   # running max m
                     pltpu.VMEM((tb, 1), jnp.float32),   # running sum l
                     pltpu.VMEM((tb, 1), jnp.float32)]   # label-logit accumulator

    if not split_k:
        grid = (Bp // tb, Cp // tc)
        kernel = functools.partial(_ce_kernel_single_k, tc=tc, exp_dtype=exp_dtype)
        in_specs = [
            pl.BlockSpec((tb, Hp), lambda i, j: (i, 0)),   # x  (bf16), resident over j
            pl.BlockSpec((Hp, tc), lambda i, j: (0, j)),   # W  (bf16)
            pl.BlockSpec((1, tc), lambda i, j: (0, j)),    # bias (f32, -1e30 padding)
            pl.BlockSpec((tb, 1), lambda i, j: (i, 0)),    # labels
        ]
        out_spec = pl.BlockSpec((tb, 1), lambda i, j: (i, 0))
        scratch = small_scratch
        dims = ("parallel", "arbitrary")
    else:
        grid = (Bp // tb, Cp // tc, Hp // tk)
        kernel = functools.partial(_ce_kernel_split_k, tc=tc, exp_dtype=exp_dtype)
        in_specs = [
            pl.BlockSpec((tb, tk), lambda i, j, k: (i, k)),   # x  (bf16)
            pl.BlockSpec((tk, tc), lambda i, j, k: (k, j)),   # W  (bf16)
            pl.BlockSpec((1, tc), lambda i, j, k: (0, j)),    # bias
            pl.BlockSpec((tb, 1), lambda i, j, k: (i, 0)),    # labels
        ]
        out_spec = pl.BlockSpec((tb, 1), lambda i, j, k: (i, 0))
        scratch = [pltpu.VMEM((tb, tc), jnp.float32)] + small_scratch
        dims = ("parallel", "arbitrary", "arbitrary")

    out = pl.pallas_call(
        kernel,
        out_shape=jax.ShapeDtypeStruct((Bp, 1), jnp.float32),
        grid_spec=pltpu.PrefetchScalarGridSpec(
            num_scalar_prefetch=0,
            grid=grid,
            in_specs=in_specs,
            out_specs=out_spec,
            scratch_shapes=scratch,
        ),
        compiler_params=pltpu.CompilerParams(
            dimension_semantics=dims,
            vmem_limit_bytes=32 << 20,
        ),
    )(xp, wp, bp, lp)
    return out[:B]


if __name__ == "__main__":
    # Deliberately non-aligned small shapes to exercise tiling + padding:
    # padded to B=16 (1 batch tile), H=256, C=256.
    B, H, C = 12, 200, 200

    key = jax.random.PRNGKey(0)
    kx, kw, kb, kl = jax.random.split(key, 4)

    x = jax.random.normal(kx, (B, H), dtype=jnp.float32)
    w = jax.random.normal(kw, (H, C), dtype=jnp.float32) * (1.0 / jnp.sqrt(H))
    b = jax.random.normal(kb, (C,), dtype=jnp.float32) * 0.01
    labels = jax.random.randint(kl, (B,), 0, C, dtype=jnp.int32)

    # Reference with the same bf16 matmul operands (kernel casts x/W to bf16
    # for the MXU, f32 accumulation), then the exact module math.
    y = jnp.dot(x.astype(jnp.bfloat16), w.astype(jnp.bfloat16),
                preferred_element_type=jnp.float32) + b[None, :]
    lab_logit = jnp.take_along_axis(y, labels[:, None], axis=-1)
    ref = jnp.sum(jnp.exp(y - lab_logit), axis=-1, keepdims=True)

    # 1) default path: single-K 2-D grid (tk = Hp), bf16 epilogue exp (v6e/v7x).
    out = cross_entropy_wrapper(x, w, b, labels)
    out = jax.block_until_ready(out)
    assert out.shape == (B, 1)
    assert jnp.allclose(out, ref, rtol=1e-2, atol=1e-3), (out, ref)

    # 2) split-K 3-D-grid fallback + f32 epilogue exp (v5e-style configuration).
    out2 = cross_entropy_wrapper(x, w, b, labels, tb=16, tc=128, tk=128,
                                 split_k=True, exp_dtype=jnp.float32)
    out2 = jax.block_until_ready(out2)
    assert out2.shape == (B, 1)
    assert jnp.allclose(out2, ref, rtol=2e-3, atol=1e-4), (out2, ref)

    print("KERNEL_OK")
</pallas_src>

<mosaic_0001>
module attributes {stable_mosaic.version = 11 : i64} {
  func.func @_ce_kernel_single_k(%arg0: i32, %arg1: i32, %arg2: memref<16x256xbf16, #tpu.memory_space<vmem>>, %arg3: memref<256x256xbf16, #tpu.memory_space<vmem>>, %arg4: memref<1x256xf32, #tpu.memory_space<vmem>>, %arg5: memref<16x1xi32, #tpu.memory_space<vmem>>, %arg6: memref<16x1xf32, #tpu.memory_space<vmem>>, %arg7: memref<16x1xf32, #tpu.memory_space<vmem>>, %arg8: memref<16x1xf32, #tpu.memory_space<vmem>>, %arg9: memref<16x1xf32, #tpu.memory_space<vmem>>) attributes {dimension_semantics = [#tpu.dimension_semantics<parallel>, #tpu.dimension_semantics<arbitrary>], iteration_bounds = array<i64: 1, 1>, scalar_prefetch = 0 : i64, scratch_operands = 3 : i64, tpu.core_type = #tpu.core_type<tc>, window_params = [{transform_indices = @transform_0, window_bounds = array<i64: 16, 256>}, {transform_indices = @transform_1, window_bounds = array<i64: 256, 256>}, {transform_indices = @transform_2, window_bounds = array<i64: 1, 256>}, {transform_indices = @transform_3, window_bounds = array<i64: 16, 1>}, {transform_indices = @transform_4, window_bounds = array<i64: 16, 1>}]} {
    %c0_i32 = arith.constant 0 : i32
    %0 = arith.cmpi eq, %arg1, %c0_i32 : i32
    %1 = arith.extui %0 : i1 to i32
    %c0_i32_0 = arith.constant 0 : i32
    %2 = arith.cmpi ne, %1, %c0_i32_0 : i32
    scf.if %2 {
      %cst_26 = arith.constant 0xFF800000 : f32
      %44 = vector.broadcast %cst_26 : f32 to vector<16x1xf32>
      %c0_27 = arith.constant 0 : index
      %c0_28 = arith.constant 0 : index
      %45 = vector.load %arg7[%c0_27, %c0_28] : memref<16x1xf32, #tpu.memory_space<vmem>>, vector<16x1xf32>
      tpu.vector_store %arg7[%c0_27, %c0_28], %44 {strides = array<i32>} : memref<16x1xf32, #tpu.memory_space<vmem>>, vector<16x1xf32>,
      %cst_29 = arith.constant 0.000000e+00 : f32
      %46 = vector.broadcast %cst_29 : f32 to vector<16x1xf32>
      %c0_30 = arith.constant 0 : index
      %c0_31 = arith.constant 0 : index
      %47 = vector.load %arg8[%c0_30, %c0_31] : memref<16x1xf32, #tpu.memory_space<vmem>>, vector<16x1xf32>
      tpu.vector_store %arg8[%c0_30, %c0_31], %46 {strides = array<i32>} : memref<16x1xf32, #tpu.memory_space<vmem>>, vector<16x1xf32>,
      %cst_32 = arith.constant 0.000000e+00 : f32
      %48 = vector.broadcast %cst_32 : f32 to vector<16x1xf32>
      %c0_33 = arith.constant 0 : index
      %c0_34 = arith.constant 0 : index
      %49 = vector.load %arg9[%c0_33, %c0_34] : memref<16x1xf32, #tpu.memory_space<vmem>>, vector<16x1xf32>
      tpu.vector_store %arg9[%c0_33, %c0_34], %48 {strides = array<i32>} : memref<16x1xf32, #tpu.memory_space<vmem>>, vector<16x1xf32>,
    } else {
    }
    %c0 = arith.constant 0 : index
    %c0_1 = arith.constant 0 : index
    %3 = vector.load %arg2[%c0, %c0_1] : memref<16x256xbf16, #tpu.memory_space<vmem>>, vector<16x256xbf16>
    %c0_2 = arith.constant 0 : index
    %c0_3 = arith.constant 0 : index
    %4 = vector.load %arg3[%c0_2, %c0_3] : memref<256x256xbf16, #tpu.memory_space<vmem>>, vector<256x256xbf16>
    %cst = arith.constant dense<0.000000e+00> : vector<16x256xf32>
    %5 = tpu.matmul %3, %4, %cst {dimension_numbers = #tpu.dot_dimension_numbers<[1], [0], [0], [1], [0, 0, 1, 1], [], []>} : vector<16x256xbf16>, vector<256x256xbf16>, vector<16x256xf32> -> vector<16x256xf32>
    %c0_4 = arith.constant 0 : index
    %c0_5 = arith.constant 0 : index
    %6 = vector.load %arg4[%c0_4, %c0_5] : memref<1x256xf32, #tpu.memory_space<vmem>>, vector<1x256xf32>
    %7 = vector.broadcast %6 : vector<1x256xf32> to vector<16x256xf32>
    %8 = arith.addf %5, %7 : vector<16x256xf32>
    %9 = tpu.iota {dimensions = array<i32: 1>} : vector<16x256xi32>
    %c256_i32 = arith.constant 256 : i32
    %10 = arith.muli %arg1, %c256_i32 : i32
    %11 = vector.broadcast %10 : i32 to vector<16x256xi32>
    %12 = arith.addi %9, %11 : vector<16x256xi32>
    %c0_6 = arith.constant 0 : index
    %c0_7 = arith.constant 0 : index
    %13 = vector.load %arg5[%c0_6, %c0_7] : memref<16x1xi32, #tpu.memory_space<vmem>>, vector<16x1xi32>
    %14 = vector.broadcast %13 : vector<16x1xi32> to vector<16x256xi32>
    %15 = arith.cmpi eq, %12, %14 : vector<16x256xi32>
    %c0_8 = arith.constant 0 : index
    %c0_9 = arith.constant 0 : index
    %16 = vector.load %arg9[%c0_8, %c0_9] : memref<16x1xf32, #tpu.memory_space<vmem>>, vector<16x1xf32>
    %cst_10 = arith.constant 0.000000e+00 : f32
    %17 = vector.broadcast %cst_10 : f32 to vector<16x256xf32>
    %18 = arith.select %15, %8, %17 : vector<16x256xi1>, vector<16x256xf32>
    %cst_11 = arith.constant dense<0.000000e+00> : vector<16xf32>
    %19 = vector.multi_reduction <add>, %18, %cst_11 [1] : vector<16x256xf32> to vector<16xf32>
    %20 = vector.shape_cast %19 : vector<16xf32> to vector<16x1xf32>
    %21 = arith.addf %16, %20 : vector<16x1xf32>
    %c0_12 = arith.constant 0 : index
    %c0_13 = arith.constant 0 : index
    %22 = vector.load %arg9[%c0_12, %c0_13] : memref<16x1xf32, #tpu.memory_space<vmem>>, vector<16x1xf32>
    tpu.vector_store %arg9[%c0_12, %c0_13], %21 {strides = array<i32>} : memref<16x1xf32, #tpu.memory_space<vmem>>, vector<16x1xf32>,
    %c0_14 = arith.constant 0 : index
    %c0_15 = arith.constant 0 : index
    %23 = vector.load %arg7[%c0_14, %c0_15] : memref<16x1xf32, #tpu.memory_space<vmem>>, vector<16x1xf32>
    %cst_16 = arith.constant dense<0xFF800000> : vector<16xf32>
    %24 = vector.multi_reduction <maximumf>, %8, %cst_16 [1] : vector<16x256xf32> to vector<16xf32>
    %25 = vector.shape_cast %24 : vector<16xf32> to vector<16x1xf32>
    %26 = arith.maximumf %23, %25 : vector<16x1xf32>
    %27 = vector.broadcast %26 : vector<16x1xf32> to vector<16x256xf32>
    %28 = arith.subf %8, %27 : vector<16x256xf32>
    %29 = arith.truncf %28 : vector<16x256xf32> to vector<16x256xbf16>
    %30 = math.exp %29 : vector<16x256xbf16>
    %31 = arith.extf %30 : vector<16x256xbf16> to vector<16x256xf32>
    %32 = arith.subf %23, %26 : vector<16x1xf32>
    %33 = math.exp %32 : vector<16x1xf32>
    %c0_17 = arith.constant 0 : index
    %c0_18 = arith.constant 0 : index
    %34 = vector.load %arg8[%c0_17, %c0_18] : memref<16x1xf32, #tpu.memory_space<vmem>>, vector<16x1xf32>
    %35 = arith.mulf %33, %34 : vector<16x1xf32>
    %cst_19 = arith.constant dense<0.000000e+00> : vector<16xf32>
    %36 = vector.multi_reduction <add>, %31, %cst_19 [1] : vector<16x256xf32> to vector<16xf32>
    %37 = vector.shape_cast %36 : vector<16xf32> to vector<16x1xf32>
    %38 = arith.addf %35, %37 : vector<16x1xf32>
    %c0_20 = arith.constant 0 : index
    %c0_21 = arith.constant 0 : index
    %39 = vector.load %arg8[%c0_20, %c0_21] : memref<16x1xf32, #tpu.memory_space<vmem>>, vector<16x1xf32>
    tpu.vector_store %arg8[%c0_20, %c0_21], %38 {strides = array<i32>} : memref<16x1xf32, #tpu.memory_space<vmem>>, vector<16x1xf32>,
    %c0_22 = arith.constant 0 : index
    %c0_23 = arith.constant 0 : index
    %40 = vector.load %arg7[%c0_22, %c0_23] : memref<16x1xf32, #tpu.memory_space<vmem>>, vector<16x1xf32>
    tpu.vector_store %arg7[%c0_22, %c0_23], %26 {strides = array<i32>} : memref<16x1xf32, #tpu.memory_space<vmem>>, vector<16x1xf32>,
    %c0_i32_24 = arith.constant 0 : i32
    %41 = arith.cmpi eq, %arg1, %c0_i32_24 : i32
    %42 = arith.extui %41 : i1 to i32
    %c0_i32_25 = arith.constant 0 : i32
    %43 = arith.cmpi ne, %42, %c0_i32_25 : i32
    scf.if %43 {
      %c0_26 = arith.constant 0 : index
      %c0_27 = arith.constant 0 : index
      %44 = vector.load %arg7[%c0_26, %c0_27] : memref<16x1xf32, #tpu.memory_space<vmem>>, vector<16x1xf32>
      %c0_28 = arith.constant 0 : index
      %c0_29 = arith.constant 0 : index
      %45 = vector.load %arg9[%c0_28, %c0_29] : memref<16x1xf32, #tpu.memory_space<vmem>>, vector<16x1xf32>
      %46 = arith.subf %44, %45 : vector<16x1xf32>
      %47 = math.exp %46 : vector<16x1xf32>
      %c0_30 = arith.constant 0 : index
      %c0_31 = arith.constant 0 : index
      %48 = vector.load %arg8[%c0_30, %c0_31] : memref<16x1xf32, #tpu.memory_space<vmem>>, vector<16x1xf32>
      %49 = arith.mulf %47, %48 : vector<16x1xf32>
      %c0_32 = arith.constant 0 : index
      %c0_33 = arith.constant 0 : index
      %50 = vector.load %arg6[%c0_32, %c0_33] : memref<16x1xf32, #tpu.memory_space<vmem>>, vector<16x1xf32>
      tpu.vector_store %arg6[%c0_32, %c0_33], %49 {strides = array<i32>} : memref<16x1xf32, #tpu.memory_space<vmem>>, vector<16x1xf32>,
    } else {
    }
    return
  }
  func.func @transform_0(%arg0: i32, %arg1: i32) -> (i32, i32) {
    %c0_i32 = arith.constant 0 : i32
    %c0_i32_0 = arith.constant 0 : i32
    return %arg0, %c0_i32 : i32, i32
  }
  func.func @transform_1(%arg0: i32, %arg1: i32) -> (i32, i32) {
    %c0_i32 = arith.constant 0 : i32
    %c0_i32_0 = arith.constant 0 : i32
    return %c0_i32, %arg1 : i32, i32
  }
  func.func @transform_2(%arg0: i32, %arg1: i32) -> (i32, i32) {
    %c0_i32 = arith.constant 0 : i32
    %c0_i32_0 = arith.constant 0 : i32
    return %c0_i32, %arg1 : i32, i32
  }
  func.func @transform_3(%arg0: i32, %arg1: i32) -> (i32, i32) {
    %c0_i32 = arith.constant 0 : i32
    %c0_i32_0 = arith.constant 0 : i32
    return %arg0, %c0_i32 : i32, i32
  }
  func.func @transform_4(%arg0: i32, %arg1: i32) -> (i32, i32) {
    %c0_i32 = arith.constant 0 : i32
    %c0_i32_0 = arith.constant 0 : i32
    return %arg0, %c0_i32 : i32, i32
  }
}

</mosaic_0001>

<llo_original>
// kernel: tpu_custom_call.1
$region0: #{tpu_custom_call.1}
  #allocation0 [shape = 'u32[]', space=smem, size = 0x4, offset = 0x4, fixed_abs, tag = 'smem constant byte address 0x4 - core index']
  #allocation1 [shape = 'u32[144,128]{1,0:T(1,128)}', space=vmem, size = 0x12000, scoped, tag = 'internal scratch']
  #allocation2 [shape = 'f32[16,1]{1,0:T(8,128)}', space=vmem, size = 0x2000, scoped, tag = 'scratch operand']
  #allocation3 [shape = 'f32[16,1]{1,0:T(8,128)}', space=vmem, size = 0x2000, scoped, tag = 'scratch operand']
  #allocation4 [shape = 'f32[16,1]{1,0:T(8,128)}', space=vmem, size = 0x2000, scoped, tag = 'scratch operand']
  %s0 = inlined_call_operand.vmem [shape: bf16[16,256], index: 0, kind: input, shape index: {}]
  %s1 = inlined_call_operand.hbm [shape: bf16[256,256], index: 1, kind: input, shape index: {}]
  %s2 = inlined_call_operand.vmem [shape: f32[1,256], index: 2, kind: input, shape index: {}]
  %s3 = inlined_call_operand.vmem [shape: s32[16,1], index: 3, kind: input, shape index: {}]
  %s4 = inlined_call_operand.vmem [shape: f32[16,1], index: 4, kind: output, shape index: {}]
  %s5 = sld [smem:[#allocation0]]
  $region38: #{tpu_custom_call.1} parent=0
    _
  %s7 = ssub.s32 1, %s5
  %s8 = scalar_select 0, %s7, %s5
  $region1: #{tpu_custom_call.1} parent=0
    #allocation5 [shape = 'u8[131072]{0}', space=vmem, size = 0x20000, scoped, tag = 'input window, operand 1, single buffered']
    #allocation6 [shape = 's32[1]{0}', space=sflag, size = 0x4, scoped, tag = 'scoped memory for tpu_custom_call.1']
    %9 = vsyncpa [#allocation6], 0
    // Predicated region
    $region2: #{tpu_custom_call.1} parent=1 // pred_check
      _
    $region3: #{tpu_custom_call.1} parent=1 // pred_check_branch
      %11 = sbr.rel (0) target = $region5
    $region4: #{tpu_custom_call.1} parent=1 // pred_region
      _
    $region5: #{tpu_custom_call.1} parent=1 // pred_fallthru
      _
    // Predicated region
    $region6: #{tpu_custom_call.1} parent=1 // pred_check
      _
    $region7: #{tpu_custom_call.1} parent=1 // pred_check_branch
      %13 = sbr.rel (0) target = $region9
    $region8: #{tpu_custom_call.1} parent=1 // pred_region
      %s15 = ssub.s32 4096, 4096
      %16 = vsyncadd [#allocation6], %s15
      %s17 = sshll.u32 [#allocation5], 4
      %s18 = int_to_ptr.vmem [resolvable:$true] %s17
      %23 = dma.hbm_to_vmem [thread:$0]  %s1, 4096, %s18, [#allocation6], 128, 128, 8
    $region9: #{tpu_custom_call.1} parent=1 // pred_fallthru
      _
    // Predicated region
    $region10: #{tpu_custom_call.1} parent=1 // pred_check
      _
    $region11: #{tpu_custom_call.1} parent=1 // pred_check_branch
      %25 = sbr.rel (0) target = $region13
    $region12: #{tpu_custom_call.1} parent=1 // pred_region
      _
    $region13: #{tpu_custom_call.1} parent=1 // pred_fallthru
      _
    // Predicated region
    $region14: #{tpu_custom_call.1} parent=1 // pred_check
      _
    $region15: #{tpu_custom_call.1} parent=1 // pred_check_branch
      %27 = sbr.rel (0) target = $region17
    $region16: #{tpu_custom_call.1} parent=1 // pred_region
      _
    $region17: #{tpu_custom_call.1} parent=1 // pred_fallthru
      _
    // Predicated region
    $region18: #{tpu_custom_call.1} parent=1 // pred_check
      _
    $region19: #{tpu_custom_call.1} parent=1 // pred_check_branch
      %29 = sbr.rel (0) target = $region21
    $region20: #{tpu_custom_call.1} parent=1 // pred_region
      %30 = dma.done [#allocation6], 4096
    $region21: #{tpu_custom_call.1} parent=1 // pred_fallthru
      _
    %p31 = scmp.eq.s32.totalorder 0, 0
    // Predicated region
    $region22: #{tpu_custom_call.1} parent=1 // pred_check
      %p32 = pneg %p31
    $region23: #{tpu_custom_call.1} parent=1 // pred_check_branch
      %34 = sbr.rel (%p32) target = $region25
    $region24: #{tpu_custom_call.1} parent=1 // pred_region
      %vm35 = vcmask 7168
      %36 = vst.msk [vmem:[#allocation2] sm:$0xff] %vm35, -inf
      %37 = vst.msk [vmem:[#allocation2 + $0x8] sm:$0xff] %vm35, -inf
      %38 = vst.msk [vmem:[#allocation3] sm:$0xff] %vm35, 0.0
      %39 = vst.msk [vmem:[#allocation3 + $0x8] sm:$0xff] %vm35, 0.0
      %40 = vst.msk [vmem:[#allocation4] sm:$0xff] %vm35, 0.0
      %41 = vst.msk [vmem:[#allocation4 + $0x8] sm:$0xff] %vm35, 0.0
    $region25: #{tpu_custom_call.1} parent=1 // pred_fallthru
      _
    %v42 = vld [vmem:[%s0] sm:$0xff]
    %v43 = vld [vmem:[%s0 + $0x8] sm:$0xff]
    %v44 = vld [vmem:[#allocation5] sm:$0xff]
    %v45 = vld [vmem:[#allocation5 + $0x8] sm:$0xff]
    %v46 = vld [vmem:[#allocation5 + $0x10] sm:$0xff]
    %v47 = vld [vmem:[#allocation5 + $0x18] sm:$0xff]
    %v48 = vld [vmem:[#allocation5 + $0x20] sm:$0xff]
    %v49 = vld [vmem:[#allocation5 + $0x28] sm:$0xff]
    %v50 = vld [vmem:[#allocation5 + $0x30] sm:$0xff]
    %v51 = vld [vmem:[#allocation5 + $0x38] sm:$0xff]
    %v52 = vld [vmem:[#allocation5 + $0x40] sm:$0xff]
    %v53 = vld [vmem:[#allocation5 + $0x48] sm:$0xff]
    %v54 = vld [vmem:[#allocation5 + $0x50] sm:$0xff]
    %v55 = vld [vmem:[#allocation5 + $0x58] sm:$0xff]
    %v56 = vld [vmem:[#allocation5 + $0x60] sm:$0xff]
    %v57 = vld [vmem:[#allocation5 + $0x68] sm:$0xff]
    %v58 = vld [vmem:[#allocation5 + $0x70] sm:$0xff]
    %v59 = vld [vmem:[#allocation5 + $0x78] sm:$0xff]
    %v60 = vld [vmem:[#allocation5 + $0x80] sm:$0xff]
    %v61 = vld [vmem:[#allocation5 + $0x88] sm:$0xff]
    %v62 = vld [vmem:[#allocation5 + $0x90] sm:$0xff]
    %v63 = vld [vmem:[#allocation5 + $0x98] sm:$0xff]
    %v64 = vld [vmem:[#allocation5 + $0xa0] sm:$0xff]
    %v65 = vld [vmem:[#allocation5 + $0xa8] sm:$0xff]
    %v66 = vld [vmem:[#allocation5 + $0xb0] sm:$0xff]
    %v67 = vld [vmem:[#allocation5 + $0xb8] sm:$0xff]
    %v68 = vld [vmem:[#allocation5 + $0xc0] sm:$0xff]
    %v69 = vld [vmem:[#allocation5 + $0xc8] sm:$0xff]
    %v70 = vld [vmem:[#allocation5 + $0xd0] sm:$0xff]
    %v71 = vld [vmem:[#allocation5 + $0xd8] sm:$0xff]
    %v72 = vld [vmem:[#allocation5 + $0xe0] sm:$0xff]
    %v73 = vld [vmem:[#allocation5 + $0xe8] sm:$0xff]
    %v74 = vld [vmem:[#allocation5 + $0xf0] sm:$0xff]
    %v75 = vld [vmem:[#allocation5 + $0xf8] sm:$0xff]
    %v76 = vld [vmem:[%s2] sm:$0x3]
    %v78 = vlaneseq
    %v79 = vshrl.u32 %v78, 7
    %v80 = vsub.s32 0, %v79
    %v81 = vrot.slane %v76, %v80
    %v82 = vlaneseq
    %v83 = vshrl.u32 %v82, 7
    %v84 = vsub.s32 1, %v83
    %v85 = vrot.slane %v76, %v84
    %v90 = vunpack.c.l.b16 %v42
    %v91 = vunpack.c.h.b16 %v42
    %v92 = vunpack.c.l.b16 %v43
    %v93 = vunpack.c.h.b16 %v43
    %v94 = vpack.c.b16 %v92, %v90
    %v95 = vpack.c.b16 %v93, %v91
    %v130 = vunpack.c.l.b16 %v44
    %v131 = vunpack.c.h.b16 %v44
    %v132 = vunpack.c.l.b16 %v45
    %v133 = vunpack.c.h.b16 %v45
    %v134 = vunpack.c.l.b16 %v46
    %v135 = vunpack.c.h.b16 %v46
    %v136 = vunpack.c.l.b16 %v47
    %v137 = vunpack.c.h.b16 %v47
    %v138 = vunpack.c.l.b16 %v48
    %v139 = vunpack.c.h.b16 %v48
    %v140 = vunpack.c.l.b16 %v49
    %v141 = vunpack.c.h.b16 %v49
    %v142 = vunpack.c.l.b16 %v50
    %v143 = vunpack.c.h.b16 %v50
    %v144 = vunpack.c.l.b16 %v51
    %v145 = vunpack.c.h.b16 %v51
    %v146 = vunpack.c.l.b16 %v52
    %v147 = vunpack.c.h.b16 %v52
    %v148 = vunpack.c.l.b16 %v53
    %v149 = vunpack.c.h.b16 %v53
    %v150 = vunpack.c.l.b16 %v54
    %v151 = vunpack.c.h.b16 %v54
    %v152 = vunpack.c.l.b16 %v55
    %v153 = vunpack.c.h.b16 %v55
    %v154 = vunpack.c.l.b16 %v56
    %v155 = vunpack.c.h.b16 %v56
    %v156 = vunpack.c.l.b16 %v57
    %v157 = vunpack.c.h.b16 %v57
    %v158 = vunpack.c.l.b16 %v58
    %v159 = vunpack.c.h.b16 %v58
    %v160 = vunpack.c.l.b16 %v59
    %v161 = vunpack.c.h.b16 %v59
    %v162 = vunpack.c.l.b16 %v60
    %v163 = vunpack.c.h.b16 %v60
    %v164 = vunpack.c.l.b16 %v61
    %v165 = vunpack.c.h.b16 %v61
    %v166 = vunpack.c.l.b16 %v62
    %v167 = vunpack.c.h.b16 %v62
    %v168 = vunpack.c.l.b16 %v63
    %v169 = vunpack.c.h.b16 %v63
    %v170 = vunpack.c.l.b16 %v64
    %v171 = vunpack.c.h.b16 %v64
    %v172 = vunpack.c.l.b16 %v65
    %v173 = vunpack.c.h.b16 %v65
    %v174 = vunpack.c.l.b16 %v66
    %v175 = vunpack.c.h.b16 %v66
    %v176 = vunpack.c.l.b16 %v67
    %v177 = vunpack.c.h.b16 %v67
    %v178 = vunpack.c.l.b16 %v68
    %v179 = vunpack.c.h.b16 %v68
    %v180 = vunpack.c.l.b16 %v69
    %v181 = vunpack.c.h.b16 %v69
    %v182 = vunpack.c.l.b16 %v70
    %v183 = vunpack.c.h.b16 %v70
    %v184 = vunpack.c.l.b16 %v71
    %v185 = vunpack.c.h.b16 %v71
    %v186 = vunpack.c.l.b16 %v72
    %v187 = vunpack.c.h.b16 %v72
    %v188 = vunpack.c.l.b16 %v73
    %v189 = vunpack.c.h.b16 %v73
    %v190 = vunpack.c.l.b16 %v74
    %v191 = vunpack.c.h.b16 %v74
    %v192 = vunpack.c.l.b16 %v75
    %v193 = vunpack.c.h.b16 %v75
    %v194 = vpack.c.b16 %v132, %v130
    %v195 = vpack.c.b16 %v133, %v131
    %v196 = vpack.c.b16 %v136, %v134
    %v197 = vpack.c.b16 %v137, %v135
    %v198 = vpack.c.b16 %v140, %v138
    %v199 = vpack.c.b16 %v141, %v139
    %v200 = vpack.c.b16 %v144, %v142
    %v201 = vpack.c.b16 %v145, %v143
    %v202 = vpack.c.b16 %v148, %v146
    %v203 = vpack.c.b16 %v149, %v147
    %v204 = vpack.c.b16 %v152, %v150
    %v205 = vpack.c.b16 %v153, %v151
    %v206 = vpack.c.b16 %v156, %v154
    %v207 = vpack.c.b16 %v157, %v155
    %v208 = vpack.c.b16 %v160, %v158
    %v209 = vpack.c.b16 %v161, %v159
    %v210 = vpack.c.b16 %v164, %v162
    %v211 = vpack.c.b16 %v165, %v163
    %v212 = vpack.c.b16 %v168, %v166
    %v213 = vpack.c.b16 %v169, %v167
    %v214 = vpack.c.b16 %v172, %v170
    %v215 = vpack.c.b16 %v173, %v171
    %v216 = vpack.c.b16 %v176, %v174
    %v217 = vpack.c.b16 %v177, %v175
    %v218 = vpack.c.b16 %v180, %v178
    %v219 = vpack.c.b16 %v181, %v179
    %v220 = vpack.c.b16 %v184, %v182
    %v221 = vpack.c.b16 %v185, %v183
    %v222 = vpack.c.b16 %v188, %v186
    %v223 = vpack.c.b16 %v189, %v187
    %v224 = vpack.c.b16 %v192, %v190
    %v225 = vpack.c.b16 %v193, %v191
    %258 = vmatprep.subr.bf16.mxu0 %v209
    %259 = vmatpush1.bf16.msra.mxu0 %v208
    %260 = vmatprep.subr.bf16.mxu0 %v207
    %261 = vmatpush1.bf16.msra.mxu0 %v206
    %262 = vmatprep.subr.bf16.mxu0 %v205
    %263 = vmatpush1.bf16.msra.mxu0 %v204
    %264 = vmatprep.subr.bf16.mxu0 %v203
    %265 = vmatpush1.bf16.msra.mxu0 %v202
    %266 = vmatprep.subr.bf16.mxu0 %v201
    %267 = vmatpush1.bf16.msra.mxu0 %v200
    %268 = vmatprep.subr.bf16.mxu0 %v199
    %269 = vmatpush1.bf16.msra.mxu0 %v198
    %270 = vmatprep.subr.bf16.mxu0 %v197
    %271 = vmatpush1.bf16.msra.mxu0 %v196
    %272 = vmatprep.subr.bf16.mxu0 %v195
    %273 = vmatpush1.bf16.msra.mxu0 %v194
    %274 = vmatprep.subr.bf16.mxu0 %v225
    %275 = vmatpush2.bf16.msra.mxu0 %v224
    %276 = vmatprep.subr.bf16.mxu0 %v223
    %277 = vmatpush2.bf16.msra.mxu0 %v222
    %278 = vmatprep.subr.bf16.mxu0 %v221
    %279 = vmatpush2.bf16.msra.mxu0 %v220
    %280 = vmatprep.subr.bf16.mxu0 %v219
    %281 = vmatpush2.bf16.msra.mxu0 %v218
    %282 = vmatprep.subr.bf16.mxu0 %v217
    %283 = vmatpush2.bf16.msra.mxu0 %v216
    %284 = vmatprep.subr.bf16.mxu0 %v215
    %285 = vmatpush2.bf16.msra.mxu0 %v214
    %286 = vmatprep.subr.bf16.mxu0 %v213
    %287 = vmatpush2.bf16.msra.mxu0 %v212
    %288 = vmatprep.subr.bf16.mxu0 %v211
    %289 = vmatpush2.bf16.msra.mxu0 %v210
    %290 = vmatprep.mubr.bf16.mxu0 %v95
    %291 = vmatmul.mubr.bf16.gmra.mxu0 %v94
    %v292 = vpop.f32.mrf.mxu0
    %v293 = vadd.f32 %v81, %v292
    %v294 = vpop.f32.mrf.mxu0
    %v295 = vadd.f32 %v85, %v294
    %v296 = vpop.f32.mrf.mxu0
    %v297 = vadd.f32 %v81, %v296
    %v298 = vpop.f32.mrf.mxu0
    %v299 = vadd.f32 %v85, %v298
    %300 = vdwg.mxu0
    %v301 = vlaneseq
    %v302 = vand.u32 %v301, 127
    %v303 = vadd.s32 %v302, 128
    %s304 = smul.u32 0, 256
    %v305 = vstv %s304
    %v306 = vadd.s32 %v302, %v305
    %v307 = vadd.s32 %v303, %v305
    %v308 = vld [vmem:[%s3] sm:$0xff]
    %v309 = vld [vmem:[%s3 + $0x8] sm:$0xff]
    %310 = vset.pattern.permute.xlu0 0
    %311 = vperm.xlu0 %310, %v308
    %v312 = vpop.permute.xlu0 %311
    %313 = vset.pattern.permute.xlu0 0
    %314 = vperm.xlu0 %313, %v309
    %v315 = vpop.permute.xlu0 %314
    %vm316 = vcmp.eq.s32.totalorder %v306, %v312
    %vm317 = vcmp.eq.s32.totalorder %v307, %v312
    %vm318 = vcmp.eq.s32.totalorder %v306, %v315
    %vm319 = vcmp.eq.s32.totalorder %v307, %v315
    %v320 = vld [vmem:[#allocation4] sm:$0xff]
    %v321 = vld [vmem:[#allocation4 + $0x8] sm:$0xff]
    %v322 = vsel %vm316, %v293, 0.0
    %v323 = vsel %vm317, %v295, 0.0
    %v324 = vsel %vm318, %v297, 0.0
    %v325 = vsel %vm319, %v299, 0.0
    %v326 = vadd.f32 %v322, %v323
    %327 = vadd.xlane.f32.xlu0 %v326
    %v328 = vpop.xlane.xlu0 %327
    %v329 = vadd.f32 %v324, %v325
    %330 = vadd.xlane.f32.xlu0 %v329
    %v331 = vpop.xlane.xlu0 %330
    %v332 = vadd.f32 %v320, %v328
    %v333 = vadd.f32 %v321, %v331
    %vm334 = vcmask 7168
    %335 = vst.msk [vmem:[#allocation4] sm:$0xff] %vm334, %v332
    %336 = vst.msk [vmem:[#allocation4 + $0x8] sm:$0xff] %vm334, %v333
    %v337 = vld [vmem:[#allocation2] sm:$0xff]
    %v338 = vld [vmem:[#allocation2 + $0x8] sm:$0xff]
    %v339 = vmax.f32 %v293, %v295
    %340 = vmax.xlane.f32.xlu0 %v339
    %v341 = vpop.xlane.xlu0 %340
    %v342 = vmax.f32 %v297, %v299
    %343 = vmax.xlane.f32.xlu0 %v342
    %v344 = vpop.xlane.xlu0 %343
    %v345 = vmax.f32 %v337, %v341
    %v346 = vmax.f32 %v338, %v344
    %348 = vset.pattern.permute.xlu0 0
    %349 = vperm.xlu0 %348, %v345
    %v350 = vpop.permute.xlu0 %349
    %353 = vset.pattern.permute.xlu0 0
    %354 = vperm.xlu0 %353, %v346
    %v355 = vpop.permute.xlu0 %354
    %v357 = vsub.f32 %v293, %v350
    %v358 = vsub.f32 %v295, %v350
    %v359 = vsub.f32 %v297, %v355
    %v360 = vsub.f32 %v299, %v355
    %v361 = vpack.c.bf16 %v359, %v357
    %v362 = vpack.c.bf16 %v360, %v358
    %v364 = vmul.bf16 %v361, 1069105081
    %v365 = vpow.bf16.pop %v364
    %v367 = vmul.bf16 %v362, 1069105081
    %v368 = vpow.bf16.pop %v367
    %v369 = vunpack.c.l.bf16 %v365
    %v370 = vunpack.c.l.bf16 %v368
    %v371 = vunpack.c.h.bf16 %v365
    %v372 = vunpack.c.h.bf16 %v368
    %v373 = vsub.f32 %v337, %v345
    %v374 = vsub.f32 %v338, %v346
    %v375 = vmul.f32 %v373, 1.442695
    %v376 = vpow.pop %v375
    %v377 = vmul.f32 %v374, 1.442695
    %v378 = vpow.pop %v377
    %v379 = vld [vmem:[#allocation3] sm:$0xff]
    %v380 = vld [vmem:[#allocation3 + $0x8] sm:$0xff]
    %v381 = vmul.f32 %v376, %v379
    %v382 = vmul.f32 %v378, %v380
    %v383 = vadd.f32 %v369, %v370
    %384 = vadd.xlane.f32.xlu0 %v383
    %v385 = vpop.xlane.xlu0 %384
    %v386 = vadd.f32 %v371, %v372
    %387 = vadd.xlane.f32.xlu0 %v386
    %v388 = vpop.xlane.xlu0 %387
    %v389 = vadd.f32 %v381, %v385
    %v390 = vadd.f32 %v382, %v388
    %391 = vst.msk [vmem:[#allocation3] sm:$0xff] %vm334, %v389
    %392 = vst.msk [vmem:[#allocation3 + $0x8] sm:$0xff] %vm334, %v390
    %393 = vst.msk [vmem:[#allocation2] sm:$0xff] %vm334, %v345
    %394 = vst.msk [vmem:[#allocation2 + $0x8] sm:$0xff] %vm334, %v346
    // Predicated region
    $region26: #{tpu_custom_call.1} parent=1 // pred_check
      %p395 = pneg %p31
    $region27: #{tpu_custom_call.1} parent=1 // pred_check_branch
      %397 = sbr.rel (%p395) target = $region29
    $region28: #{tpu_custom_call.1} parent=1 // pred_region
      %v398 = vld [vmem:[#allocation2] sm:$0xff]
      %v399 = vld [vmem:[#allocation2 + $0x8] sm:$0xff]
      %v400 = vld [vmem:[#allocation4] sm:$0xff]
      %v401 = vld [vmem:[#allocation4 + $0x8] sm:$0xff]
      %v402 = vsub.f32 %v398, %v400
      %v403 = vsub.f32 %v399, %v401
      %v404 = vmul.f32 %v402, 1.442695
      %v405 = vpow.pop %v404
      %v406 = vmul.f32 %v403, 1.442695
      %v407 = vpow.pop %v406
      %v408 = vld [vmem:[#allocation3] sm:$0xff]
      %v409 = vld [vmem:[#allocation3 + $0x8] sm:$0xff]
      %v410 = vmul.f32 %v405, %v408
      %v411 = vmul.f32 %v407, %v409
      %412 = vst.msk [vmem:[%s4] sm:$0xff] %vm334, %v410
      %413 = vst.msk [vmem:[%s4 + $0x8] sm:$0xff] %vm334, %v411
    $region29: #{tpu_custom_call.1} parent=1 // pred_fallthru
      _
    // Predicated region
    $region30: #{tpu_custom_call.1} parent=1 // pred_check
      _
    $region31: #{tpu_custom_call.1} parent=1 // pred_check_branch
      %415 = sbr.rel (0) target = $region33
    $region32: #{tpu_custom_call.1} parent=1 // pred_region
      _
    $region33: #{tpu_custom_call.1} parent=1 // pred_fallthru
      _
    // Predicated region
    $region34: #{tpu_custom_call.1} parent=1 // pred_check
      _
    $region35: #{tpu_custom_call.1} parent=1 // pred_check_branch
      %417 = sbr.rel (0) target = $region37
    $region36: #{tpu_custom_call.1} parent=1 // pred_region
      _
    $region37: #{tpu_custom_call.1} parent=1 // pred_fallthru
      _
    %418 = vsyncpa [#allocation6], 1

</llo_original>
